<compile_context>
chip_gen: v6e
topology: v6e:2x2x1
jax: 0.10.0
libtpu: 0.0.40
codegen_flags: <defaults>
</compile_context>

<pallas_src>
import jax
import jax.numpy as jnp
from jax.experimental import pallas as pl
from jax.experimental.pallas import tpu as pltpu


# --------------------------------------------------------------------------
# Kernels
# --------------------------------------------------------------------------
def _gen_unit_kernel_single_k(x_ref, w_ref, b_ref, o_ref):
    """Single K step: dot + bias + sin, written straight to the output tile."""
    y = jnp.dot(x_ref[...], w_ref[...], preferred_element_type=jnp.float32)
    o_ref[...] = jnp.sin(y + b_ref[...].astype(jnp.float32)).astype(o_ref.dtype)


def _gen_unit_kernel_multi_k(x_ref, w_ref, b_ref, o_ref, acc_ref):
    """Multi K step: f32 VMEM accumulator, epilogue (bias + sin) on last k."""
    k = pl.program_id(2)

    @pl.when(k == 0)
    def _():
        acc_ref[...] = jnp.zeros_like(acc_ref)

    acc_ref[...] += jnp.dot(x_ref[...], w_ref[...],
                            preferred_element_type=jnp.float32)

    @pl.when(k == pl.num_programs(2) - 1)
    def _():
        y = acc_ref[...] + b_ref[...].astype(jnp.float32)
        o_ref[...] = jnp.sin(y).astype(o_ref.dtype)


# --------------------------------------------------------------------------
# Tiling helpers
# --------------------------------------------------------------------------
def _round_up(x, a):
    return -(-x // a) * a


def _sublane_align(dtype):
    isz = jnp.dtype(dtype).itemsize
    if isz == 2:
        return 16
    if isz == 1:
        return 32
    return 8


def _pick_tile(extent, target, align):
    """Full-extent block when it fits the target, else an aligned tile."""
    if extent <= target:
        return extent
    return max(align, (target // align) * align)


def _pick_tk(k_extent, target):
    """Pick the K tile.  Prefer full K (single step, no pad); else the largest
    128-multiple divisor of K; zero-padding only as a last resort."""
    if k_extent <= target:
        return k_extent, 0
    t = max(128, (target // 128) * 128)
    for cand in range(t, 0, -128):
        if k_extent % cand == 0:
            return cand, 0
    pad = (-k_extent) % t
    return t, pad


# --------------------------------------------------------------------------
# Parameter preparation (one-time, at load) + forward
# --------------------------------------------------------------------------
def prepare_params(w, b, matmul_dtype=jnp.bfloat16):
    """One-time param prep: PyTorch [out, in] -> [in, out] + cast to the MXU
    operand dtype.  The weight is constant across calls, so this transpose /
    cast never enters per-call HBM traffic.  Bias stays f32 (f32 epilogue)."""
    n_dim, d_model = w.shape
    assert b.shape == (n_dim,)
    w_kn = jnp.asarray(w).T.astype(matmul_dtype)            # [K, N]
    b2 = jnp.asarray(b).reshape(1, n_dim).astype(jnp.float32)
    return w_kn, b2


def generative_unit_forward_prepared(
    x, w_kn, b2, *, tile_m=512, tile_n=512, tile_k=1024,
):
    """y = sin(x @ W^T + b) with W already prepared as w_kn = W.T (cast)."""
    d_model, n_dim = w_kn.shape
    assert x.shape[-1] == d_model and b2.shape == (1, n_dim)

    lead_shape = x.shape[:-1]
    out_dtype = x.dtype
    x2 = x.reshape(-1, d_model).astype(w_kn.dtype)  # stream-cast once, on host
    m = x2.shape[0]

    if m == 0:  # empty-input guard
        return jnp.zeros((*lead_shape, n_dim), out_dtype)

    # ---- tile selection ----------------------------------------------------
    tm = _pick_tile(m, tile_m, _sublane_align(w_kn.dtype))
    tn = _pick_tile(n_dim, tile_n, 256)
    tk, k_pad = _pick_tk(d_model, tile_k)

    # v7x megacore: guarantee >= 2 parallel tiles so both TensorCores get work.
    if pl.cdiv(m, tm) * pl.cdiv(n_dim, tn) < 2 and n_dim > 256:
        tn = min(tn, _round_up(pl.cdiv(n_dim, 2), 128))

    if k_pad:
        # Rare fallback: K > tile_k with no 128-multiple divisor.  Zero-pad the
        # reduction axis (exact: padded products contribute 0).
        x2 = jnp.pad(x2, ((0, 0), (0, k_pad)))
        w_kn = jnp.pad(w_kn, ((0, k_pad), (0, 0)))
    k_total = d_model + k_pad
    num_k = k_total // tk
    multi_k = num_k > 1

    # ---- VMEM budget: double-buffered blocks (+ f32 accumulator if multi-K) -
    op_b = jnp.dtype(w_kn.dtype).itemsize
    out_b = jnp.dtype(out_dtype).itemsize
    blk_bytes = tm * tk * op_b + tk * tn * op_b + tn * 4 + tm * tn * out_b
    vmem_est = 2 * blk_bytes + (tm * tn * 4 if multi_k else 0)
    vmem_limit = int(min(max(int(vmem_est * 1.5), 16 * 2**20), 50 * 2**20))

    if multi_k:
        grid = (pl.cdiv(m, tm), pl.cdiv(n_dim, tn), num_k)
        out = pl.pallas_call(
            _gen_unit_kernel_multi_k,
            out_shape=jax.ShapeDtypeStruct((m, n_dim), out_dtype),
            grid_spec=pltpu.PrefetchScalarGridSpec(
                num_scalar_prefetch=0,
                grid=grid,
                in_specs=[
                    pl.BlockSpec((tm, tk), lambda i, j, k: (i, k)),   # x
                    pl.BlockSpec((tk, tn), lambda i, j, k: (k, j)),   # W [in, out]
                    pl.BlockSpec((1, tn), lambda i, j, k: (0, j)),    # bias
                ],
                out_specs=pl.BlockSpec((tm, tn), lambda i, j, k: (i, j)),
                scratch_shapes=[pltpu.VMEM((tm, tn), jnp.float32)],
            ),
            compiler_params=pltpu.CompilerParams(
                dimension_semantics=("parallel", "parallel", "arbitrary"),
                vmem_limit_bytes=vmem_limit,
            ),
        )(x2, w_kn, b2)
    else:
        grid = (pl.cdiv(m, tm), pl.cdiv(n_dim, tn))
        out = pl.pallas_call(
            _gen_unit_kernel_single_k,
            out_shape=jax.ShapeDtypeStruct((m, n_dim), out_dtype),
            grid_spec=pltpu.PrefetchScalarGridSpec(
                num_scalar_prefetch=0,
                grid=grid,
                in_specs=[
                    pl.BlockSpec((tm, tk), lambda i, j: (i, 0)),      # x
                    pl.BlockSpec((tk, tn), lambda i, j: (0, j)),      # W [in, out]
                    pl.BlockSpec((1, tn), lambda i, j: (0, j)),       # bias
                ],
                out_specs=pl.BlockSpec((tm, tn), lambda i, j: (i, j)),
            ),
            compiler_params=pltpu.CompilerParams(
                dimension_semantics=("parallel", "parallel"),
                vmem_limit_bytes=vmem_limit,
            ),
        )(x2, w_kn, b2)

    return out.reshape(*lead_shape, n_dim)


def generative_unit_forward(x, w, b, *, matmul_dtype=jnp.bfloat16, **tile_kwargs):
    """Convenience wrapper taking the raw PyTorch-layout weight [out, in].

    For repeated calls, call `prepare_params` once at load time and use
    `generative_unit_forward_prepared` so the transpose/cast is not per-call.
    The default bf16 operand path is NOT bit-comparable to a f32 torch Linear
    (~1e-2-level differences); pass matmul_dtype=jnp.float32 for exactness.
    """
    w_kn, b2 = prepare_params(w, b, matmul_dtype)
    return generative_unit_forward_prepared(x, w_kn, b2, **tile_kwargs)


# --------------------------------------------------------------------------
# Self-test
# --------------------------------------------------------------------------
if __name__ == "__main__":
    # Small shapes consistent with the module: batch=2, seq=8, d_model=32.
    batch, seq, d_model = 2, 8, 32

    key = jax.random.PRNGKey(0)
    kx, kw, kb = jax.random.split(key, 3)

    # Synthetic params mimicking nn.Linear init (uniform +/- 1/sqrt(d)).
    bound = 1.0 / (d_model ** 0.5)
    w = jax.random.uniform(kw, (d_model, d_model), jnp.float32, -bound, bound)
    b = jax.random.uniform(kb, (d_model,), jnp.float32, -bound, bound)
    x = jax.random.normal(kx, (batch, seq, d_model), jnp.float32)

    y_ref = jnp.sin(x @ w.T + b)

    # f32-operand path (test-only): tight check of the tiling / fusion logic.
    y_f32 = jax.block_until_ready(
        generative_unit_forward(x, w, b, matmul_dtype=jnp.float32))
    assert y_f32.shape == (batch, seq, d_model)
    assert jnp.allclose(y_f32, y_ref, atol=1e-4, rtol=1e-4)

    # Production bf16-operand path via one-time prepared params.
    w_kn, b_row = prepare_params(w, b)                    # bf16, [in, out]
    y_bf16 = jax.block_until_ready(
        generative_unit_forward_prepared(x, w_kn, b_row))
    assert y_bf16.shape == (batch, seq, d_model)
    assert jnp.allclose(y_bf16, y_ref, atol=2e-2, rtol=2e-2)

    # Tiled path #1: single-K fast path (tk = full 640, NO zero-pad), split N
    # (>=2 parallel tiles), ragged last M (300) and ragged last N blocks.
    d2, m2 = 640, 300
    kw2, kb2, kx2 = jax.random.split(jax.random.PRNGKey(1), 3)
    bound2 = 1.0 / (d2 ** 0.5)
    w2 = jax.random.uniform(kw2, (d2, d2), jnp.float32, -bound2, bound2)
    b2v = jax.random.uniform(kb2, (d2,), jnp.float32, -bound2, bound2)
    x2 = jax.random.normal(kx2, (m2, d2), jnp.float32)
    y2_ref = jnp.sin(x2 @ w2.T + b2v)

    y2 = jax.block_until_ready(
        generative_unit_forward(x2, w2, b2v, matmul_dtype=jnp.float32))
    assert jnp.allclose(y2, y2_ref, atol=1e-3, rtol=1e-3)

    # Tiled path #2: force the multi-K accumulator path (tk=128 divides 640,
    # still no zero-pad).
    y3 = jax.block_until_ready(
        generative_unit_forward(x2, w2, b2v, matmul_dtype=jnp.float32,
                                tile_k=256))
    assert jnp.allclose(y3, y2_ref, atol=1e-3, rtol=1e-3)

    # Production bf16 path at the tiled shape (looser tolerance).
    y4 = jax.block_until_ready(generative_unit_forward(x2, w2, b2v))
    assert jnp.allclose(y4, y2_ref, atol=5e-2, rtol=5e-2)

    print("KERNEL_OK")
</pallas_src>

<mosaic_0001>
module attributes {stable_mosaic.version = 11 : i64} {
  func.func @_gen_unit_kernel_single_k(%arg0: i32, %arg1: i32, %arg2: memref<16x32xf32, #tpu.memory_space<vmem>>, %arg3: memref<32x32xf32, #tpu.memory_space<vmem>>, %arg4: memref<1x32xf32, #tpu.memory_space<vmem>>, %arg5: memref<16x32xf32, #tpu.memory_space<vmem>>) attributes {dimension_semantics = [#tpu.dimension_semantics<parallel>, #tpu.dimension_semantics<parallel>], iteration_bounds = array<i64: 1, 1>, scalar_prefetch = 0 : i64, scratch_operands = 0 : i64, tpu.core_type = #tpu.core_type<tc>, window_params = [{transform_indices = @transform_0, window_bounds = array<i64: 16, 32>}, {transform_indices = @transform_1, window_bounds = array<i64: 32, 32>}, {transform_indices = @transform_2, window_bounds = array<i64: 1, 32>}, {transform_indices = @transform_3, window_bounds = array<i64: 16, 32>}]} {
    %c0 = arith.constant 0 : index
    %c0_0 = arith.constant 0 : index
    %0 = vector.load %arg2[%c0, %c0_0] : memref<16x32xf32, #tpu.memory_space<vmem>>, vector<16x32xf32>
    %c0_1 = arith.constant 0 : index
    %c0_2 = arith.constant 0 : index
    %1 = vector.load %arg3[%c0_1, %c0_2] : memref<32x32xf32, #tpu.memory_space<vmem>>, vector<32x32xf32>
    %cst = arith.constant dense<0.000000e+00> : vector<16x32xf32>
    %2 = tpu.matmul %0, %1, %cst {dimension_numbers = #tpu.dot_dimension_numbers<[1], [0], [0], [1], [0, 0, 1, 1], [], []>} : vector<16x32xf32>, vector<32x32xf32>, vector<16x32xf32> -> vector<16x32xf32>
    %c0_3 = arith.constant 0 : index
    %c0_4 = arith.constant 0 : index
    %3 = vector.load %arg4[%c0_3, %c0_4] : memref<1x32xf32, #tpu.memory_space<vmem>>, vector<1x32xf32>
    %4 = vector.broadcast %3 : vector<1x32xf32> to vector<16x32xf32>
    %5 = arith.addf %2, %4 : vector<16x32xf32>
    %6 = math.sin %5 : vector<16x32xf32>
    %c0_5 = arith.constant 0 : index
    %c0_6 = arith.constant 0 : index
    %7 = vector.load %arg5[%c0_5, %c0_6] : memref<16x32xf32, #tpu.memory_space<vmem>>, vector<16x32xf32>
    tpu.vector_store %arg5[%c0_5, %c0_6], %6 {strides = array<i32>} : memref<16x32xf32, #tpu.memory_space<vmem>>, vector<16x32xf32>,
    return
  }
  func.func @transform_0(%arg0: i32, %arg1: i32) -> (i32, i32) {
    %c0_i32 = arith.constant 0 : i32
    %c0_i32_0 = arith.constant 0 : i32
    return %arg0, %c0_i32 : i32, i32
  }
  func.func @transform_1(%arg0: i32, %arg1: i32) -> (i32, i32) {
    %c0_i32 = arith.constant 0 : i32
    %c0_i32_0 = arith.constant 0 : i32
    return %c0_i32, %arg1 : i32, i32
  }
  func.func @transform_2(%arg0: i32, %arg1: i32) -> (i32, i32) {
    %c0_i32 = arith.constant 0 : i32
    %c0_i32_0 = arith.constant 0 : i32
    return %c0_i32, %arg1 : i32, i32
  }
  func.func @transform_3(%arg0: i32, %arg1: i32) -> (i32, i32) {
    %c0_i32 = arith.constant 0 : i32
    return %arg0, %arg1 : i32, i32
  }
}

</mosaic_0001>

<llo_original>
// kernel: tpu_custom_call.1
$region0: #{tpu_custom_call.1}
  #allocation0 [shape = 'u32[]', space=smem, size = 0x4, offset = 0x4, fixed_abs, tag = 'smem constant byte address 0x4 - core index']
  #allocation1 [shape = 'u32[144,128]{1,0:T(1,128)}', space=vmem, size = 0x12000, scoped, tag = 'internal scratch']
  %s0 = inlined_call_operand.hbm [shape: f32[16,32], index: 0, kind: input, shape index: {}]
  %s1 = inlined_call_operand.hbm [shape: f32[32,32], index: 1, kind: input, shape index: {}]
  %s2 = inlined_call_operand.vmem [shape: f32[1,32], index: 2, kind: input, shape index: {}]
  %s3 = inlined_call_operand.hbm [shape: f32[16,32], index: 3, kind: output, shape index: {}]
  %s4 = sld [smem:[#allocation0]]
  $region30: #{tpu_custom_call.1} parent=0
    _
  %s6 = ssub.s32 1, %s4
  %s7 = scalar_select 0, %s6, %s4
  $region1: #{tpu_custom_call.1} parent=0
    #allocation2 [shape = 'u8[8192]{0}', space=vmem, size = 0x2000, scoped, tag = 'input window, operand 0, single buffered']
    #allocation3 [shape = 's32[1]{0}', space=sflag, size = 0x4, scoped, tag = 'scoped memory for tpu_custom_call.1']
    #allocation4 [shape = 's32[1]{0}', space=sflag, size = 0x4, scoped, tag = 'scoped memory for tpu_custom_call.1']
    #allocation5 [shape = 'u8[16384]{0}', space=vmem, size = 0x4000, scoped, tag = 'input window, operand 1, single buffered']
    #allocation6 [shape = 's32[1]{0}', space=sflag, size = 0x4, scoped, tag = 'scoped memory for tpu_custom_call.1']
    #allocation7 [shape = 'u8[8192]{0}', space=vmem, size = 0x2000, scoped, tag = 'output window, operand 0, single buffered']
    %8 = vsyncpa [#allocation3], 0
    %9 = vsyncpa [#allocation6], 0
    %10 = vsyncpa [#allocation4], 0
    // Predicated region
    $region2: #{tpu_custom_call.1} parent=1 // pred_check
      _
    $region3: #{tpu_custom_call.1} parent=1 // pred_check_branch
      %12 = sbr.rel (0) target = $region5
    $region4: #{tpu_custom_call.1} parent=1 // pred_region
      %s14 = ssub.s32 256, 256
      %15 = vsyncadd [#allocation3], %s14
      %s16 = sshll.u32 [#allocation2], 4
      %s17 = int_to_ptr.vmem [resolvable:$true] %s16
      %22 = dma.hbm_to_vmem [thread:$0]  %s0, 256, %s17, [#allocation3], 128, 128, 8
    $region5: #{tpu_custom_call.1} parent=1 // pred_fallthru
      _
    // Predicated region
    $region6: #{tpu_custom_call.1} parent=1 // pred_check
      _
    $region7: #{tpu_custom_call.1} parent=1 // pred_check_branch
      %24 = sbr.rel (0) target = $region9
    $region8: #{tpu_custom_call.1} parent=1 // pred_region
      %s26 = ssub.s32 512, 512
      %27 = vsyncadd [#allocation6], %s26
      %s28 = sshll.u32 [#allocation5], 4
      %s29 = int_to_ptr.vmem [resolvable:$true] %s28
      %34 = dma.hbm_to_vmem [thread:$0]  %s1, 512, %s29, [#allocation6], 128, 128, 8
    $region9: #{tpu_custom_call.1} parent=1 // pred_fallthru
      _
    // Predicated region
    $region10: #{tpu_custom_call.1} parent=1 // pred_check
      _
    $region11: #{tpu_custom_call.1} parent=1 // pred_check_branch
      %36 = sbr.rel (0) target = $region13
    $region12: #{tpu_custom_call.1} parent=1 // pred_region
      _
    $region13: #{tpu_custom_call.1} parent=1 // pred_fallthru
      _
    // Predicated region
    $region14: #{tpu_custom_call.1} parent=1 // pred_check
      _
    $region15: #{tpu_custom_call.1} parent=1 // pred_check_branch
      %38 = sbr.rel (0) target = $region17
    $region16: #{tpu_custom_call.1} parent=1 // pred_region
      %39 = dma.done [#allocation3], 256
    $region17: #{tpu_custom_call.1} parent=1 // pred_fallthru
      _
    // Predicated region
    $region18: #{tpu_custom_call.1} parent=1 // pred_check
      _
    $region19: #{tpu_custom_call.1} parent=1 // pred_check_branch
      %41 = sbr.rel (0) target = $region21
    $region20: #{tpu_custom_call.1} parent=1 // pred_region
      %42 = dma.done [#allocation6], 512
    $region21: #{tpu_custom_call.1} parent=1 // pred_fallthru
      _
    %v43 = vld [vmem:[#allocation2] sm:$0xff]
    %v44 = vld [vmem:[#allocation2 + $0x8] sm:$0xff]
    %v45 = vld [vmem:[#allocation5] sm:$0xff]
    %v46 = vld [vmem:[#allocation5 + $0x8] sm:$0xff]
    %v47 = vld [vmem:[#allocation5 + $0x10] sm:$0xff]
    %v48 = vld [vmem:[#allocation5 + $0x18] sm:$0xff]
    %v49 = vld [vmem:[%s2] sm:$0x1]
    %v51 = vlaneseq
    %v52 = vshrl.u32 %v51, 7
    %v53 = vsub.s32 0, %v52
    %v54 = vrot.slane %v49, %v53
    %vm56 = vcmask 261120
    %v58 = vsel %vm56, %v43, 0
    %v61 = vsel %vm56, %v44, 0
    %63 = vmatprep.subr.mxu0 0.0
    %64 = vmatpush1.msra.mxu0 0.0
    %65 = vmatprep.subr.mxu0 0.0
    %66 = vmatpush1.msra.mxu0 0.0
    %67 = vmatprep.subr.mxu0 0.0
    %68 = vmatpush1.msra.mxu0 0.0
    %69 = vmatprep.subr.mxu0 0.0
    %70 = vmatpush1.msra.mxu0 0.0
    %71 = vmatprep.subr.mxu0 0.0
    %72 = vmatpush1.msra.mxu0 0.0
    %73 = vmatprep.subr.mxu0 0.0
    %74 = vmatpush1.msra.mxu0 0.0
    %75 = vmatprep.subr.mxu0 0.0
    %76 = vmatpush1.msra.mxu0 0.0
    %77 = vmatprep.subr.mxu0 0.0
    %78 = vmatpush1.msra.mxu0 0.0
    %79 = vmatprep.subr.mxu0 0.0
    %80 = vmatpush1.msra.mxu0 0.0
    %81 = vmatprep.subr.mxu0 0.0
    %82 = vmatpush1.msra.mxu0 0.0
    %83 = vmatprep.subr.mxu0 0.0
    %84 = vmatpush1.msra.mxu0 0.0
    %85 = vmatprep.subr.mxu0 0.0
    %86 = vmatpush1.msra.mxu0 0.0
    %87 = vmatprep.subr.mxu0 0.0
    %88 = vmatpush1.msra.mxu0 %v48
    %89 = vmatprep.subr.mxu0 0.0
    %90 = vmatpush1.msra.mxu0 %v47
    %91 = vmatprep.subr.mxu0 0.0
    %92 = vmatpush1.msra.mxu0 %v46
    %93 = vmatprep.subr.mxu0 0.0
    %94 = vmatpush1.msra.mxu0 %v45
    %95 = vmatprep.subr.mxu0 0.0
    %96 = vmatpush2.msra.mxu0 0.0
    %97 = vmatprep.subr.mxu0 0.0
    %98 = vmatpush2.msra.mxu0 0.0
    %99 = vmatprep.subr.mxu0 0.0
    %100 = vmatpush2.msra.mxu0 0.0
    %101 = vmatprep.subr.mxu0 0.0
    %102 = vmatpush2.msra.mxu0 0.0
    %103 = vmatprep.subr.mxu0 0.0
    %104 = vmatpush2.msra.mxu0 0.0
    %105 = vmatprep.subr.mxu0 0.0
    %106 = vmatpush2.msra.mxu0 0.0
    %107 = vmatprep.subr.mxu0 0.0
    %108 = vmatpush2.msra.mxu0 0.0
    %109 = vmatprep.subr.mxu0 0.0
    %110 = vmatpush2.msra.mxu0 0.0
    %111 = vmatprep.subr.mxu0 0.0
    %112 = vmatpush2.msra.mxu0 0.0
    %113 = vmatprep.subr.mxu0 0.0
    %114 = vmatpush2.msra.mxu0 0.0
    %115 = vmatprep.subr.mxu0 0.0
    %116 = vmatpush2.msra.mxu0 0.0
    %117 = vmatprep.subr.mxu0 0.0
    %118 = vmatpush2.msra.mxu0 0.0
    %119 = vmatprep.subr.mxu0 0.0
    %120 = vmatpush2.msra.mxu0 0.0
    %121 = vmatprep.subr.mxu0 0.0
    %122 = vmatpush2.msra.mxu0 0.0
    %123 = vmatprep.subr.mxu0 0.0
    %124 = vmatpush2.msra.mxu0 0.0
    %125 = vmatprep.subr.mxu0 0.0
    %126 = vmatpush2.msra.mxu0 0.0
    %127 = vmatprep.mubr.f32.mxu0 0.0
    %128 = vmatmul.mubr.f32.gmra.mxu0 %v58
    %v129 = vpop.f32.mrf.mxu0
    %v130 = vadd.f32 %v54, %v129
    %v131 = vpop.f32.mrf.mxu0
    %132 = vmatprep.mubr.f32.mxu0 0.0
    %133 = vmatmul.mubr.f32.gmra.mxu0 %v61
    %v134 = vpop.f32.mrf.mxu0
    %v135 = vadd.f32 %v54, %v134
    %v136 = vpop.f32.mrf.mxu0
    %137 = vdwg.mxu0
    %v138 = vand.u32 2147483647, %v130
    %vm139 = vcmp.le.f32.partialorder %v138, 0.7853982
    %vm140 = vcmp.lt.s32.totalorder %v130, 0
    %v141 = vand.u32 %v130, 2139095040
    %v142 = vshrl.u32 %v141, 23
    %v143 = vsub.s32 %v142, 127
    %v144 = vand.u32 2147483647, %v130
    %v145 = vand.u32 %v144, 8388607
    %v146 = vor.u32 %v145, 8388608
    %v147 = vsub.s32 0, %v146
    %v148 = vadd.s32 %v143, 1
    %vm149 = vcmp.gt.s32.totalorder %v148, 0
    %v150 = vsel %vm149, %v148, 0
    %v151 = vshrl.u32 %v150, 5
    %v152 = vand.u32 %v150, 31
    %v153 = vsub.s32 32, %v152
    %v154 = vshrl.u32 683565275, %v153
    %v155 = vshll.u32 683565275, %v152
    %v156 = vshrl.u32 2475754826, %v153
    %v157 = vor.u32 %v155, %v156
    %v158 = vshll.u32 2475754826, %v152
    %v159 = vshrl.u32 2131351028, %v153
    %v160 = vor.u32 %v158, %v159
    %v161 = vshll.u32 2131351028, %v152
    %v162 = vshrl.u32 2102212464, %v153
    %v163 = vor.u32 %v161, %v162
    %v164 = vshll.u32 2102212464, %v152
    %v165 = vshrl.u32 920167782, %v153
    %v166 = vor.u32 %v164, %v165
    %v167 = vshll.u32 920167782, %v152
    %v168 = vshrl.u32 1326507024, %v153
    %v169 = vor.u32 %v167, %v168
    %vm170 = vcmp.lt.s32.totalorder %v151, 1
    %vm171 = vcmp.lt.s32.totalorder %v151, 2
    %vm172 = vcmp.lt.s32.totalorder %v151, 3
    %vm173 = vcmp.lt.s32.totalorder %v151, 4
    %v174 = vsel %vm170, %v154, %v157
    %v175 = vsel %vm173, %v163, 2102212464
    %v176 = vsel %vm172, %v160, %v175
    %v177 = vsel %vm171, %v174, %v176
    %v178 = vsel %vm170, %v157, %v160
    %v179 = vsel %vm173, %v166, 920167782
    %v180 = vsel %vm172, %v163, %v179
    %v181 = vsel %vm171, %v178, %v180
    %v182 = vsel %vm170, %v160, %v163
    %v183 = vsel %vm173, %v169, 1326507024
    %v184 = vsel %vm172, %v166, %v183
    %v185 = vsel %vm171, %v182, %v184
    %v186 = vshll.u32 %v146, 8
    %v187 = vmul.u32.u64.compose %v186, %v185
    %v188 = vextract.low.u32 %v187
    %v189 = vextract.high.u32 %v187
    %v190 = vmul.u32.u64.compose %v186, %v181
    %v191 = vextract.low.u32 %v190
    %v192 = vextract.high.u32 %v190
    %v193 = vmul.u32 %v186, %v177
    %v194 = vadd.s32 %v189, %v191
    %vm195 = vc.u32 %v189, %v191
    %v196 = vadd.s32 %v192, 1
    %v197 = vsel %vm195, %v196, %v192
    %v198 = vadd.s32 %v193, %v197
    %v199 = vadd.s32 %v198, 536870912
    %v200 = vshrl.u32 %v199, 30
    %v201 = vshll.u32 %v200, 30
    %v202 = vsub.s32 %v198, %v201
    %vm203 = vcmp.lt.s32.totalorder %v202, 0
    %v204 = vsub.s32 0, %v202
    %v205 = vsel %vm203, %v204, %v202
    %v206 = vclz %v205
    %v207 = vsub.s32 %v206, 2
    %vm208 = vcmp.gt.s32.totalorder 0, %v207
    %v209 = vsel %vm208, 0, %v207
    %v210 = vsub.s32 32, %v209
    %v211 = vshll.u32 %v202, %v209
    %v212 = vshrl.u32 %v194, %v210
    %v213 = vor.u32 %v211, %v212
    %v214 = vsub.s32 4294967266, %v209
    %v215 = vadd.s32 %v214, 127
    %v216 = vshll.u32 %v215, 23
    %v217 = vor.u32 4788187, %v216
    %v218 = vand.u32 2147483647, %v217
    %v220 = vcvt.s32.f32 %v213
    %v221 = vmul.f32 %v220, %v218
    %v222 = vxor.u32 %v221, 2147483648
    %v223 = vsel %vm140, %v222, %v221
    %v224 = vsub.s32 4, %v200
    %v225 = vsel %vm140, %v224, %v200
    %v226 = vsel %vm139, %v130, %v223
    %v227 = vsel %vm139, 0, %v225
    %v228 = vcosq.f32.pop %v226
    %v229 = vsinq.f32.pop %v226
    %vm230 = vweird.f32 %v130
    %v231 = vadd.s32 %v227, 3
    %v232 = vand.u32 %v231, 3
    %vm233 = vcmp.lt.s32.totalorder %v232, 2
    %vm234 = vcmp.eq.s32.totalorder %v232, 0
    %v235 = vxor.u32 %v229, 2147483648
    %v236 = vsel %vm234, %v228, %v235
    %vm237 = vcmp.eq.s32.totalorder %v232, 2
    %v238 = vxor.u32 %v228, 2147483648
    %v239 = vsel %vm237, %v238, %v229
    %v240 = vsel %vm233, %v236, %v239
    %v241 = vsel %vm230, nan, %v240
    %v242 = vand.u32 2147483647, %v135
    %vm243 = vcmp.le.f32.partialorder %v242, 0.7853982
    %vm244 = vcmp.lt.s32.totalorder %v135, 0
    %v245 = vand.u32 %v135, 2139095040
    %v246 = vshrl.u32 %v245, 23
    %v247 = vsub.s32 %v246, 127
    %v248 = vand.u32 2147483647, %v135
    %v249 = vand.u32 %v248, 8388607
    %v250 = vor.u32 %v249, 8388608
    %v251 = vsub.s32 0, %v250
    %v252 = vadd.s32 %v247, 1
    %vm253 = vcmp.gt.s32.totalorder %v252, 0
    %v254 = vsel %vm253, %v252, 0
    %v255 = vshrl.u32 %v254, 5
    %v256 = vand.u32 %v254, 31
    %v257 = vsub.s32 32, %v256
    %v258 = vshrl.u32 683565275, %v257
    %v259 = vshll.u32 683565275, %v256
    %v260 = vshrl.u32 2475754826, %v257
    %v261 = vor.u32 %v259, %v260
    %v262 = vshll.u32 2475754826, %v256
    %v263 = vshrl.u32 2131351028, %v257
    %v264 = vor.u32 %v262, %v263
    %v265 = vshll.u32 2131351028, %v256
    %v266 = vshrl.u32 2102212464, %v257
    %v267 = vor.u32 %v265, %v266
    %v268 = vshll.u32 2102212464, %v256
    %v269 = vshrl.u32 920167782, %v257
    %v270 = vor.u32 %v268, %v269
    %v271 = vshll.u32 920167782, %v256
    %v272 = vshrl.u32 1326507024, %v257
    %v273 = vor.u32 %v271, %v272
    %vm274 = vcmp.lt.s32.totalorder %v255, 1
    %vm275 = vcmp.lt.s32.totalorder %v255, 2
    %vm276 = vcmp.lt.s32.totalorder %v255, 3
    %vm277 = vcmp.lt.s32.totalorder %v255, 4
    %v278 = vsel %vm274, %v258, %v261
    %v279 = vsel %vm277, %v267, 2102212464
    %v280 = vsel %vm276, %v264, %v279
    %v281 = vsel %vm275, %v278, %v280
    %v282 = vsel %vm274, %v261, %v264
    %v283 = vsel %vm277, %v270, 920167782
    %v284 = vsel %vm276, %v267, %v283
    %v285 = vsel %vm275, %v282, %v284
    %v286 = vsel %vm274, %v264, %v267
    %v287 = vsel %vm277, %v273, 1326507024
    %v288 = vsel %vm276, %v270, %v287
    %v289 = vsel %vm275, %v286, %v288
    %v290 = vshll.u32 %v250, 8
    %v291 = vmul.u32.u64.compose %v290, %v289
    %v292 = vextract.low.u32 %v291
    %v293 = vextract.high.u32 %v291
    %v294 = vmul.u32.u64.compose %v290, %v285
    %v295 = vextract.low.u32 %v294
    %v296 = vextract.high.u32 %v294
    %v297 = vmul.u32 %v290, %v281
    %v298 = vadd.s32 %v293, %v295
    %vm299 = vc.u32 %v293, %v295
    %v300 = vadd.s32 %v296, 1
    %v301 = vsel %vm299, %v300, %v296
    %v302 = vadd.s32 %v297, %v301
    %v303 = vadd.s32 %v302, 536870912
    %v304 = vshrl.u32 %v303, 30
    %v305 = vshll.u32 %v304, 30
    %v306 = vsub.s32 %v302, %v305
    %vm307 = vcmp.lt.s32.totalorder %v306, 0
    %v308 = vsub.s32 0, %v306
    %v309 = vsel %vm307, %v308, %v306
    %v310 = vclz %v309
    %v311 = vsub.s32 %v310, 2
    %vm312 = vcmp.gt.s32.totalorder 0, %v311
    %v313 = vsel %vm312, 0, %v311
    %v314 = vsub.s32 32, %v313
    %v315 = vshll.u32 %v306, %v313
    %v316 = vshrl.u32 %v298, %v314
    %v317 = vor.u32 %v315, %v316
    %v318 = vsub.s32 4294967266, %v313
    %v319 = vadd.s32 %v318, 127
    %v320 = vshll.u32 %v319, 23
    %v321 = vor.u32 4788187, %v320
    %v322 = vand.u32 2147483647, %v321
    %v324 = vcvt.s32.f32 %v317
    %v325 = vmul.f32 %v324, %v322
    %v326 = vxor.u32 %v325, 2147483648
    %v327 = vsel %vm244, %v326, %v325
    %v328 = vsub.s32 4, %v304
    %v329 = vsel %vm244, %v328, %v304
    %v330 = vsel %vm243, %v135, %v327
    %v331 = vsel %vm243, 0, %v329
    %v332 = vcosq.f32.pop %v330
    %v333 = vsinq.f32.pop %v330
    %vm334 = vweird.f32 %v135
    %v335 = vadd.s32 %v331, 3
    %v336 = vand.u32 %v335, 3
    %vm337 = vcmp.lt.s32.totalorder %v336, 2
    %vm338 = vcmp.eq.s32.totalorder %v336, 0
    %v339 = vxor.u32 %v333, 2147483648
    %v340 = vsel %vm338, %v332, %v339
    %vm341 = vcmp.eq.s32.totalorder %v336, 2
    %v342 = vxor.u32 %v332, 2147483648
    %v343 = vsel %vm341, %v342, %v333
    %v344 = vsel %vm337, %v340, %v343
    %v345 = vsel %vm334, nan, %v344
    %346 = vst.msk [vmem:[#allocation7] sm:$0xff] %vm56, %v241
    %347 = vst.msk [vmem:[#allocation7 + $0x8] sm:$0xff] %vm56, %v345
    // Predicated region
    $region22: #{tpu_custom_call.1} parent=1 // pred_check
      _
    $region23: #{tpu_custom_call.1} parent=1 // pred_check_branch
      %349 = sbr.rel (0) target = $region25
    $region24: #{tpu_custom_call.1} parent=1 // pred_region
      %s351 = ssub.s32 256, 256
      %352 = vsyncadd [#allocation4], %s351
      %s353 = sshll.u32 [#allocation7], 4
      %s354 = int_to_ptr.vmem [resolvable:$true] %s353
      %359 = dma.vmem_to_hbm [thread:$0]  %s354, 256, %s3, [#allocation4], 128, 128, 8
    $region25: #{tpu_custom_call.1} parent=1 // pred_fallthru
      _
    // Predicated region
    $region26: #{tpu_custom_call.1} parent=1 // pred_check
      _
    $region27: #{tpu_custom_call.1} parent=1 // pred_check_branch
      %361 = sbr.rel (0) target = $region29
    $region28: #{tpu_custom_call.1} parent=1 // pred_region
      %362 = dma.done [#allocation4], 256
    $region29: #{tpu_custom_call.1} parent=1 // pred_fallthru
      _
    %363 = vsyncpa [#allocation3], 1
    %364 = vsyncpa [#allocation6], 1
    %365 = vsyncpa [#allocation4], 1

</llo_original>
